<compile_context>
chip_gen: v7x
topology: tpu7x:2x2x1
jax: 0.10.0
libtpu: 0.0.40
codegen_flags: <defaults>
</compile_context>

<pallas_src>
import functools

import jax
import jax.numpy as jnp
from jax.experimental import pallas as pl
from jax.experimental.pallas import tpu as pltpu


_DEFAULT_TILE_N = 64 * 1024          # lanes per grid step (multiple of 128)
_DEFAULT_VMEM_LIMIT = 48 * 1024 * 1024


def _round_up(x, m):
    return -(-x // m) * m


def focal_loss_kernel(pred_ref, tgt_ref, alpha_ref, out_ref, acc_ref, *,
                      gamma, n_valid, tile_n, tiles_per_core):
    """One grid step: a (C, tile_n) slab of logits -> per-lane partial sums."""
    c = pl.program_id(0)          # core-split axis ("parallel")
    i = pl.program_id(1)          # batch-tile axis ("arbitrary", accumulator)

    # Zero the per-lane accumulator at the start of each core's tile loop.
    @pl.when(i == 0)
    def _():
        acc_ref[...] = jnp.zeros_like(acc_ref)

    pred = pred_ref[...].astype(jnp.float32)        # (C, tile_n), math in f32
    tgt = tgt_ref[...].astype(jnp.int32)            # (1, tile_n) int8 -> int32
    alpha = alpha_ref[...].astype(jnp.float32)      # (C, 1)

    # Numerically stable log-softmax pieces along the class (sublane) axis.
    m = jnp.max(pred, axis=0, keepdims=True)                   # (1, tile_n)
    shifted = pred - m                                         # (C, tile_n)
    es = jnp.exp(shifted)                                      # (C, tile_n) EUP
    sumexp = jnp.sum(es, axis=0, keepdims=True)                # (1, tile_n)
    lse = jnp.log(sumexp)                                      # (1, tile_n) EUP

    # One-hot gather of the target class (class ids live on the sublane axis).
    cls_ids = jax.lax.broadcasted_iota(jnp.int32, pred.shape, 0)
    onehot = (cls_ids == tgt).astype(jnp.float32)              # (C, tile_n)

    # logpt = log_softmax[target]; pt reuses es (no second exp on the EUP).
    logpt = jnp.sum(shifted * onehot, axis=0, keepdims=True) - lse
    pt = jnp.sum(es * onehot, axis=0, keepdims=True) / sumexp
    alpha_t = jnp.sum(alpha * onehot, axis=0, keepdims=True)

    ce_loss = -logpt
    # gamma is a static Python int -> lax.integer_pow (VPU), not exp/log (EUP).
    focal = alpha_t * (1.0 - pt) ** gamma * ce_loss            # (1, tile_n)

    # Mask padded / duplicated / ragged-tail columns by global column index
    # (no wrapper-side padding; partial-block tails contain unspecified data).
    t = c * tiles_per_core + i
    col = t * tile_n + jax.lax.broadcasted_iota(jnp.int32, focal.shape, 1)
    focal = jnp.where(col < n_valid, focal, 0.0)

    # Per-lane accumulation; the cross-lane reduce happens once, at the end.
    acc_ref[...] += focal

    @pl.when(i == pl.num_programs(1) - 1)
    def _():
        out_ref[...] = jnp.sum(acc_ref[...], keepdims=True).reshape(1, 1, 1)


def multiclass_focal_loss_with_alpha(pred, target, alpha, gamma=2,
                                     tile_n=None,
                                     pred_feed_dtype=jnp.bfloat16,
                                     vmem_limit_bytes=_DEFAULT_VMEM_LIMIT):
    """pred: (N, C) float logits, target: (N,) int, alpha: (C,) float.

    Returns the mean-reduced multi-class focal loss (scalar f32), matching
    PyTorch MultiClassFocalLossWithAlpha.forward with reduction='mean'.
    """
    N, C = pred.shape

    # Lane-dense (C, N) layout: class on sublane, batch on lane.  The dtype
    # downcast fuses with the transpose so the staging copy is half-size.
    pred_t = jnp.transpose(pred, (1, 0)).astype(pred_feed_dtype)
    tgt_t = target.astype(jnp.int8).reshape(1, N)          # 1 B/sample stream
    alpha2d = jnp.asarray(alpha, dtype=jnp.float32).reshape(C, 1)

    # Batch tile: as large as VMEM comfortably allows, multiple of 128.
    if tile_n is None:
        tile_n = _DEFAULT_TILE_N
    tile_n = max(128, min(_round_up(tile_n, 128), _round_up(N, 128)))

    n_tiles = pl.cdiv(N, tile_n)
    # Use both TensorCores on v7x (leading "parallel" axis); harmless on
    # single-TC chips.  Skip the split when there is only one tile.
    n_split = 2 if n_tiles > 1 else 1
    tiles_per_core = pl.cdiv(n_tiles, n_split)

    def data_idx(c, i):
        # Clamp so a core never indexes past the last block; a duplicated
        # block is fully zeroed by the in-kernel `col < n_valid` mask.
        return jnp.minimum(c * tiles_per_core + i, n_tiles - 1)

    kernel = functools.partial(focal_loss_kernel, gamma=int(gamma), n_valid=N,
                               tile_n=tile_n, tiles_per_core=tiles_per_core)

    out = pl.pallas_call(
        kernel,
        out_shape=jax.ShapeDtypeStruct((n_split, 1, 1), jnp.float32),
        grid_spec=pltpu.PrefetchScalarGridSpec(
            num_scalar_prefetch=0,
            grid=(n_split, tiles_per_core),
            in_specs=[
                pl.BlockSpec((C, tile_n), lambda c, i: (0, data_idx(c, i))),
                pl.BlockSpec((1, tile_n), lambda c, i: (0, data_idx(c, i))),
                pl.BlockSpec((C, 1), lambda c, i: (0, 0)),       # resident
            ],
            out_specs=pl.BlockSpec((1, 1, 1), lambda c, i: (c, 0, 0)),
            scratch_shapes=[pltpu.VMEM((1, tile_n), jnp.float32)],
        ),
        compiler_params=pltpu.CompilerParams(
            dimension_semantics=("parallel", "arbitrary"),
            vmem_limit_bytes=vmem_limit_bytes,
        ),
    )(pred_t, tgt_t, alpha2d)

    # reduction == 'mean': sum the per-core partials and divide by N.
    return jnp.sum(out) / float(N)


def _reference(pred, target, alpha, gamma=2):
    # Pure-JAX reference mirroring the PyTorch forward (reduction='mean').
    log_sm = jax.nn.log_softmax(pred.astype(jnp.float32), axis=1)
    logpt = jnp.take_along_axis(
        log_sm, target.reshape(-1, 1).astype(jnp.int32), axis=1).reshape(-1)
    ce = -logpt
    pt = jnp.exp(logpt)
    a = jnp.asarray(alpha, jnp.float32)[target]
    return jnp.mean(a * (1.0 - pt) ** gamma * ce)


if __name__ == "__main__":
    key = jax.random.PRNGKey(0)
    k1, k2, k3, k4, k5, k6 = jax.random.split(key, 6)

    alpha = jnp.array([0.2, 0.3, 0.5], dtype=jnp.float32)  # module default
    C = 3

    # Case 1: tiny batch, f32 feed -> matches the f32 reference tightly.
    N1 = 8
    pred1 = jax.random.normal(k1, (N1, C), dtype=jnp.float32)
    tgt1 = jax.random.randint(k2, (N1,), 0, C, dtype=jnp.int32)
    loss1 = jax.block_until_ready(
        multiclass_focal_loss_with_alpha(pred1, tgt1, alpha, gamma=2,
                                         pred_feed_dtype=jnp.float32))
    ref1 = _reference(pred1, tgt1, alpha, gamma=2)
    assert jnp.allclose(loss1, ref1, atol=1e-6, rtol=1e-5), (loss1, ref1)

    # Case 2: ragged batch, default bf16 logits feed; compare against the
    # reference evaluated on the same bf16-rounded logits (math is f32).
    N2 = 1000
    pred2 = jax.random.normal(k3, (N2, C), dtype=jnp.float32)
    tgt2 = jax.random.randint(k4, (N2,), 0, C, dtype=jnp.int32)
    loss2 = jax.block_until_ready(
        multiclass_focal_loss_with_alpha(pred2, tgt2, alpha, gamma=2))
    ref2 = _reference(pred2.astype(jnp.bfloat16).astype(jnp.float32),
                      tgt2, alpha, gamma=2)
    assert jnp.allclose(loss2, ref2, atol=1e-5, rtol=1e-4), (loss2, ref2)

    # Case 3: forced small tile -> multiple tiles, odd tile count: exercises
    # the two-core split, block-index clamping and ragged-tail masking.
    N3 = 650
    pred3 = jax.random.normal(k5, (N3, C), dtype=jnp.float32)
    tgt3 = jax.random.randint(k6, (N3,), 0, C, dtype=jnp.int32)
    loss3 = jax.block_until_ready(
        multiclass_focal_loss_with_alpha(pred3, tgt3, alpha, gamma=2,
                                         tile_n=256,
                                         pred_feed_dtype=jnp.float32))
    ref3 = _reference(pred3, tgt3, alpha, gamma=2)
    assert jnp.allclose(loss3, ref3, atol=1e-6, rtol=1e-5), (loss3, ref3)

    print("KERNEL_OK")
</pallas_src>

<mosaic_0001>
module attributes {stable_mosaic.version = 11 : i64} {
  func.func @focal_loss_kernel(%arg0: i32, %arg1: i32, %arg2: memref<3x128xf32, #tpu.memory_space<vmem>>, %arg3: memref<1x128xi8, #tpu.memory_space<vmem>>, %arg4: memref<3x1xf32, #tpu.memory_space<vmem>>, %arg5: memref<1x1x1xf32, #tpu.memory_space<vmem>>, %arg6: memref<1x128xf32, #tpu.memory_space<vmem>>) attributes {dimension_semantics = [#tpu.dimension_semantics<parallel>, #tpu.dimension_semantics<arbitrary>], iteration_bounds = array<i64: 1, 1>, scalar_prefetch = 0 : i64, scratch_operands = 1 : i64, tpu.core_type = #tpu.core_type<tc>, window_params = [{transform_indices = @transform_0, window_bounds = array<i64: 3, 128>}, {transform_indices = @transform_1, window_bounds = array<i64: 1, 128>}, {pipeline_mode = #tpu.pipeline_mode<synchronous>, transform_indices = @transform_2, window_bounds = array<i64: 3, 1>}, {transform_indices = @transform_3, window_bounds = array<i64: 1, 1, 1>}]} {
    %c0_i32 = arith.constant 0 : i32
    %0 = arith.cmpi eq, %arg1, %c0_i32 : i32
    %1 = arith.extui %0 : i1 to i32
    %c0_i32_0 = arith.constant 0 : i32
    %2 = arith.cmpi ne, %1, %c0_i32_0 : i32
    scf.if %2 {
      %cst_19 = arith.constant 0.000000e+00 : f32
      %55 = vector.broadcast %cst_19 : f32 to vector<1x128xf32>
      %c0_20 = arith.constant 0 : index
      %c0_21 = arith.constant 0 : index
      %56 = vector.load %arg6[%c0_20, %c0_21] : memref<1x128xf32, #tpu.memory_space<vmem>>, vector<1x128xf32>
      tpu.vector_store %arg6[%c0_20, %c0_21], %55 {strides = array<i32>} : memref<1x128xf32, #tpu.memory_space<vmem>>, vector<1x128xf32>,
    } else {
    }
    %c0 = arith.constant 0 : index
    %c0_1 = arith.constant 0 : index
    %3 = vector.load %arg2[%c0, %c0_1] : memref<3x128xf32, #tpu.memory_space<vmem>>, vector<3x128xf32>
    %c0_2 = arith.constant 0 : index
    %c0_3 = arith.constant 0 : index
    %4 = vector.load %arg3[%c0_2, %c0_3] : memref<1x128xi8, #tpu.memory_space<vmem>>, vector<1x128xi8>
    %5 = arith.extsi %4 : vector<1x128xi8> to vector<1x128xi32>
    %c0_4 = arith.constant 0 : index
    %c0_5 = arith.constant 0 : index
    %6 = vector.load %arg4[%c0_4, %c0_5] : memref<3x1xf32, #tpu.memory_space<vmem>>, vector<3x1xf32>
    %cst = arith.constant dense<0xFF800000> : vector<128xf32>
    %7 = vector.multi_reduction <maximumf>, %3, %cst [0] : vector<3x128xf32> to vector<128xf32>
    %8 = vector.shape_cast %7 : vector<128xf32> to vector<1x128xf32>
    %9 = vector.broadcast %8 : vector<1x128xf32> to vector<3x128xf32>
    %10 = arith.subf %3, %9 : vector<3x128xf32>
    %11 = math.exp %10 : vector<3x128xf32>
    %cst_6 = arith.constant dense<0.000000e+00> : vector<128xf32>
    %12 = vector.multi_reduction <add>, %11, %cst_6 [0] : vector<3x128xf32> to vector<128xf32>
    %13 = vector.shape_cast %12 : vector<128xf32> to vector<1x128xf32>
    %14 = math.log %13 : vector<1x128xf32>
    %15 = tpu.iota {dimensions = array<i32: 0>} : vector<3x128xi32>
    %16 = vector.broadcast %5 : vector<1x128xi32> to vector<3x128xi32>
    %17 = arith.cmpi eq, %15, %16 : vector<3x128xi32>
    %18 = arith.extui %17 : vector<3x128xi1> to vector<3x128xi32>
    %19 = arith.sitofp %18 : vector<3x128xi32> to vector<3x128xf32>
    %20 = arith.mulf %10, %19 : vector<3x128xf32>
    %cst_7 = arith.constant dense<0.000000e+00> : vector<128xf32>
    %21 = vector.multi_reduction <add>, %20, %cst_7 [0] : vector<3x128xf32> to vector<128xf32>
    %22 = vector.shape_cast %21 : vector<128xf32> to vector<1x128xf32>
    %23 = arith.subf %22, %14 : vector<1x128xf32>
    %24 = arith.mulf %11, %19 : vector<3x128xf32>
    %cst_8 = arith.constant dense<0.000000e+00> : vector<128xf32>
    %25 = vector.multi_reduction <add>, %24, %cst_8 [0] : vector<3x128xf32> to vector<128xf32>
    %26 = vector.shape_cast %25 : vector<128xf32> to vector<1x128xf32>
    %27 = arith.divf %26, %13 : vector<1x128xf32>
    %28 = vector.broadcast %6 : vector<3x1xf32> to vector<3x128xf32>
    %29 = arith.mulf %28, %19 : vector<3x128xf32>
    %cst_9 = arith.constant dense<0.000000e+00> : vector<128xf32>
    %30 = vector.multi_reduction <add>, %29, %cst_9 [0] : vector<3x128xf32> to vector<128xf32>
    %31 = vector.shape_cast %30 : vector<128xf32> to vector<1x128xf32>
    %cst_10 = arith.constant 0.000000e+00 : f32
    %32 = vector.broadcast %cst_10 : f32 to vector<1x128xf32>
    %33 = arith.subf %32, %23 : vector<1x128xf32>
    %cst_11 = arith.constant 1.000000e+00 : f32
    %34 = vector.broadcast %cst_11 : f32 to vector<1x128xf32>
    %35 = arith.subf %34, %27 : vector<1x128xf32>
    %36 = arith.mulf %35, %35 : vector<1x128xf32>
    %37 = arith.mulf %31, %36 : vector<1x128xf32>
    %38 = arith.mulf %37, %33 : vector<1x128xf32>
    %c1_i32 = arith.constant 1 : i32
    %39 = arith.muli %arg0, %c1_i32 : i32
    %40 = arith.addi %39, %arg1 : i32
    %c128_i32 = arith.constant 128 : i32
    %41 = arith.muli %40, %c128_i32 : i32
    %42 = tpu.iota {dimensions = array<i32: 1>} : vector<1x128xi32>
    %43 = vector.broadcast %41 : i32 to vector<1x128xi32>
    %44 = arith.addi %43, %42 : vector<1x128xi32>
    %c8_i32 = arith.constant 8 : i32
    %45 = vector.broadcast %c8_i32 : i32 to vector<1x128xi32>
    %46 = arith.cmpi slt, %44, %45 : vector<1x128xi32>
    %cst_12 = arith.constant 0.000000e+00 : f32
    %47 = vector.broadcast %cst_12 : f32 to vector<1x128xf32>
    %48 = arith.select %46, %38, %47 : vector<1x128xi1>, vector<1x128xf32>
    %c0_13 = arith.constant 0 : index
    %c0_14 = arith.constant 0 : index
    %49 = vector.load %arg6[%c0_13, %c0_14] : memref<1x128xf32, #tpu.memory_space<vmem>>, vector<1x128xf32>
    %50 = arith.addf %49, %48 : vector<1x128xf32>
    %c0_15 = arith.constant 0 : index
    %c0_16 = arith.constant 0 : index
    %51 = vector.load %arg6[%c0_15, %c0_16] : memref<1x128xf32, #tpu.memory_space<vmem>>, vector<1x128xf32>
    tpu.vector_store %arg6[%c0_15, %c0_16], %50 {strides = array<i32>} : memref<1x128xf32, #tpu.memory_space<vmem>>, vector<1x128xf32>,
    %c0_i32_17 = arith.constant 0 : i32
    %52 = arith.cmpi eq, %arg1, %c0_i32_17 : i32
    %53 = arith.extui %52 : i1 to i32
    %c0_i32_18 = arith.constant 0 : i32
    %54 = arith.cmpi ne, %53, %c0_i32_18 : i32
    scf.if %54 {
      %c0_19 = arith.constant 0 : index
      %c0_20 = arith.constant 0 : index
      %55 = vector.load %arg6[%c0_19, %c0_20] : memref<1x128xf32, #tpu.memory_space<vmem>>, vector<1x128xf32>
      %56 = vector.shape_cast %55 : vector<1x128xf32> to vector<1x1x128xf32>
      %cst_21 = arith.constant dense<0.000000e+00> : vector<1xf32>
      %57 = vector.multi_reduction <add>, %56, %cst_21 [1, 2] : vector<1x1x128xf32> to vector<1xf32>
      %58 = vector.shape_cast %57 : vector<1xf32> to vector<1x1x1xf32>
      %59 = vector.extract %58[0, 0, 0] : f32 from vector<1x1x1xf32>
      %60 = vector.broadcast %59 : f32 to vector<1x1xf32>
      %61 = vector.shape_cast %60 : vector<1x1xf32> to vector<1x1x1xf32>
      %c0_22 = arith.constant 0 : index
      %c0_23 = arith.constant 0 : index
      %c0_24 = arith.constant 0 : index
      %62 = vector.load %arg5[%c0_22, %c0_23, %c0_24] : memref<1x1x1xf32, #tpu.memory_space<vmem>>, vector<1x1x1xf32>
      tpu.vector_store %arg5[%c0_22, %c0_23, %c0_24], %61 {strides = array<i32>} : memref<1x1x1xf32, #tpu.memory_space<vmem>>, vector<1x1x1xf32>,
    } else {
    }
    return
  }
  func.func @transform_0(%arg0: i32, %arg1: i32) -> (i32, i32) {
    %c1_i32 = arith.constant 1 : i32
    %0 = arith.muli %arg0, %c1_i32 : i32
    %1 = arith.addi %0, %arg1 : i32
    %c0_i32 = arith.constant 0 : i32
    %2 = arith.minsi %1, %c0_i32 : i32
    %c0_i32_0 = arith.constant 0 : i32
    %c0_i32_1 = arith.constant 0 : i32
    return %c0_i32_0, %2 : i32, i32
  }
  func.func @transform_1(%arg0: i32, %arg1: i32) -> (i32, i32) {
    %c1_i32 = arith.constant 1 : i32
    %0 = arith.muli %arg0, %c1_i32 : i32
    %1 = arith.addi %0, %arg1 : i32
    %c0_i32 = arith.constant 0 : i32
    %2 = arith.minsi %1, %c0_i32 : i32
    %c0_i32_0 = arith.constant 0 : i32
    %c0_i32_1 = arith.constant 0 : i32
    return %c0_i32_0, %2 : i32, i32
  }
  func.func @transform_2(%arg0: i32, %arg1: i32) -> (i32, i32) {
    %c0_i32 = arith.constant 0 : i32
    %c0_i32_0 = arith.constant 0 : i32
    %c0_i32_1 = arith.constant 0 : i32
    return %c0_i32, %c0_i32_0 : i32, i32
  }
  func.func @transform_3(%arg0: i32, %arg1: i32) -> (i32, i32, i32) {
    %c0_i32 = arith.constant 0 : i32
    %c0_i32_0 = arith.constant 0 : i32
    %c0_i32_1 = arith.constant 0 : i32
    return %arg0, %c0_i32, %c0_i32_0 : i32, i32, i32
  }
}

</mosaic_0001>

<llo_original>
// kernel: tpu_custom_call.1
$region0: #{tpu_custom_call.1}
  #allocation0 [shape = 'u32[]', space=smem, size = 0x4, offset = 0x4, fixed_abs, tag = 'smem constant byte address 0x4 - core index']
  #allocation1 [shape = 'u32[144,128]{1,0:T(1,128)}', space=vmem, size = 0x12000, scoped, tag = 'internal scratch']
  #allocation2 [shape = 'f32[1,128]{1,0:T(1,128)}', space=vmem, size = 0x200, scoped, tag = 'scratch operand']
  %s0 = inlined_call_operand.vmem [shape: f32[3,8], index: 0, kind: input, shape index: {}]
  %s1 = inlined_call_operand.vmem [shape: s8[1,8], index: 1, kind: input, shape index: {}]
  %s2 = inlined_call_operand.vmem [shape: f32[3,1], index: 2, kind: input, shape index: {}]
  %s3 = inlined_call_operand.hbm [shape: f32[1,1,1], index: 3, kind: output, shape index: {}]
  %s4 = sld [smem:[#allocation0]]
  $region30: #{tpu_custom_call.1} parent=0
    _
  %s6 = ssub.s32 1, %s4
  %s7 = scalar_select 0, %s6, %s4
  $region1: #{tpu_custom_call.1} parent=0
    #allocation3 [shape = 'u8[512]{0}', space=vmem, size = 0x400, scoped, tag = 'output window, operand 0, single buffered']
    #allocation4 [shape = 's32[1]{0}', space=sflag, size = 0x4, scoped, tag = 'scoped memory for tpu_custom_call.1']
    %8 = vsyncpa [#allocation4], 0
    // Predicated region
    $region2: #{tpu_custom_call.1} parent=1 // pred_check
      _
    $region3: #{tpu_custom_call.1} parent=1 // pred_check_branch
      %10 = sbr.rel (0) target = $region5
    $region4: #{tpu_custom_call.1} parent=1 // pred_region
      %s11 = sadd.s32 0, 0
      %p12 = scmp.lt.s32.totalorder %s11, 0
      %s13 = scalar_select %p12, %s11, 0
      %p14 = scmp.lt.s32.totalorder %s13, 0
      %s15 = scalar_select %p14, %s13, 0
      %s16 = smul.addr %s15, 4
      %s17 = scalar_lea.vmem %s0, %s16
      %s18 = sadd.s32 0, 0
      %p19 = scmp.lt.s32.totalorder %s18, 0
      %s20 = scalar_select %p19, %s18, 0
    $region5: #{tpu_custom_call.1} parent=1 // pred_fallthru
      _
    // Predicated region
    $region6: #{tpu_custom_call.1} parent=1 // pred_check
      _
    $region7: #{tpu_custom_call.1} parent=1 // pred_check_branch
      %22 = sbr.rel (0) target = $region9
    $region8: #{tpu_custom_call.1} parent=1 // pred_region
      %s23 = sadd.s32 0, 0
      %p24 = scmp.lt.s32.totalorder %s23, 0
      %s25 = scalar_select %p24, %s23, 0
      %p26 = scmp.lt.s32.totalorder %s25, 0
      %s27 = scalar_select %p26, %s25, 0
      %s28 = scalar_lea.vmem %s1, %s27
      %s29 = sadd.s32 0, 0
      %p30 = scmp.lt.s32.totalorder %s29, 0
      %s31 = scalar_select %p30, %s29, 0
    $region9: #{tpu_custom_call.1} parent=1 // pred_fallthru
      _
    // Predicated region
    $region10: #{tpu_custom_call.1} parent=1 // pred_check
      _
    $region11: #{tpu_custom_call.1} parent=1 // pred_check_branch
      %33 = sbr.rel (0) target = $region13
    $region12: #{tpu_custom_call.1} parent=1 // pred_region
      _
    $region13: #{tpu_custom_call.1} parent=1 // pred_fallthru
      _
    %s34 = sadd.s32 0, 0
    %p35 = scmp.lt.s32.totalorder %s34, 0
    %s36 = scalar_select %p35, %s34, 0
    %p37 = scmp.lt.s32.totalorder %s36, 0
    %s38 = scalar_select %p37, %s36, 0
    %s39 = smul.addr %s38, 4
    %s40 = scalar_lea.vmem %s0, %s39
    %s41 = sadd.s32 0, 0
    %p42 = scmp.lt.s32.totalorder %s41, 0
    %s43 = scalar_select %p42, %s41, 0
    %p44 = scmp.lt.s32.totalorder %s43, 0
    %s45 = scalar_select %p44, %s43, 0
    %s46 = scalar_lea.vmem %s1, %s45
    %s47 = sadd.s32 0, 0
    %p48 = scmp.lt.s32.totalorder %s47, 0
    %s49 = scalar_select %p48, %s47, 0
    %p50 = scmp.lt.s32.totalorder %s49, 0
    %s51 = scalar_select %p50, %s49, 0
    %s52 = smul.addr %s51, 4
    %s53 = scalar_lea.vmem %s0, %s52
    %s54 = sadd.s32 0, 0
    %p55 = scmp.lt.s32.totalorder %s54, 0
    %s56 = scalar_select %p55, %s54, 0
    %s57 = sadd.s32 0, 0
    %p58 = scmp.lt.s32.totalorder %s57, 0
    %s59 = scalar_select %p58, %s57, 0
    %p60 = scmp.lt.s32.totalorder %s59, 0
    %s61 = scalar_select %p60, %s59, 0
    %s62 = scalar_lea.vmem %s1, %s61
    %s63 = sadd.s32 0, 0
    %p64 = scmp.lt.s32.totalorder %s63, 0
    %s65 = scalar_select %p64, %s63, 0
    %p66 = scmp.eq.s32.totalorder 0, 0
    // Predicated region
    $region14: #{tpu_custom_call.1} parent=1 // pred_check
      %p67 = pneg %p66
    $region15: #{tpu_custom_call.1} parent=1 // pred_check_branch
      %69 = sbr.rel (%p67) target = $region17
    $region16: #{tpu_custom_call.1} parent=1 // pred_region
      %70 = vst [vmem:[#allocation2] sm:$0x1] 0.0
    $region17: #{tpu_custom_call.1} parent=1 // pred_fallthru
      _
    %v71 = vld [vmem:[%s53] sm:$0x7]
    %v72 = vld [vmem:[%s62] sm:$0x1]
    %v73 = vunpack.c.0.s8 %v72
    %v74 = vld [vmem:[%s2] sm:$0x7]
    %vm75 = vcmask 1042432
    %v76 = vsel %vm75, %v71, -inf
    %v77 = vrot.slane %v76, 4
    %v78 = vmax.f32 %v76, %v77
    %v79 = vrot.slane %v78, 2
    %v80 = vmax.f32 %v78, %v79
    %v81 = vrot.slane %v80, 1
    %v82 = vmax.f32 %v80, %v81
    %v83 = vsub.f32 %v71, %v82
    %v84 = vmul.f32 %v83, 1.442695
    %v85 = vpow.pop %v84
    %v86 = vsel %vm75, %v85, 0.0
    %v87 = vrot.slane %v86, 4
    %v88 = vadd.f32 %v86, %v87
    %v89 = vrot.slane %v88, 2
    %v90 = vadd.f32 %v88, %v89
    %v91 = vrot.slane %v90, 1
    %v92 = vadd.f32 %v90, %v91
    %v93 = vlog2.pop %v92
    %v94 = vmul.f32 %v93, 0.6931472
    %v95 = vlaneseq
    %v96 = vshrl.u32 %v95, 7
    %v97 = vlaneseq
    %v98 = vshrl.u32 %v97, 7
    %v99 = vsub.s32 0, %v98
    %v100 = vrot.slane %v73, %v99
    %vm101 = vcmp.eq.s32.totalorder %v96, %v100
    %v102 = vsel %vm101, 1, 0
    %v103 = vcvt.s32.f32 %v102
    %v104 = vmul.f32 %v83, %v103
    %v105 = vsel %vm75, %v104, 0.0
    %v106 = vrot.slane %v105, 4
    %v107 = vadd.f32 %v105, %v106
    %v108 = vrot.slane %v107, 2
    %v109 = vadd.f32 %v107, %v108
    %v110 = vrot.slane %v109, 1
    %v111 = vadd.f32 %v109, %v110
    %v112 = vsub.f32 %v111, %v94
    %v113 = vmul.f32 %v85, %v103
    %v114 = vsel %vm75, %v113, 0.0
    %v115 = vrot.slane %v114, 4
    %v116 = vadd.f32 %v114, %v115
    %v117 = vrot.slane %v116, 2
    %v118 = vadd.f32 %v116, %v117
    %v119 = vrot.slane %v118, 1
    %v120 = vadd.f32 %v118, %v119
    %v121 = vrcp.pop %v92
    %v122 = vmul.f32 %v120, %v121
    %124 = vset.pattern.permute.xlu0 0
    %125 = vperm.xlu0 %124, %v74
    %v126 = vpop.permute.xlu0 %125
    %v128 = vmul.f32 %v126, %v103
    %v129 = vsel %vm75, %v128, 0.0
    %v130 = vrot.slane %v129, 4
    %v131 = vadd.f32 %v129, %v130
    %v132 = vrot.slane %v131, 2
    %v133 = vadd.f32 %v131, %v132
    %v134 = vrot.slane %v133, 1
    %v135 = vadd.f32 %v133, %v134
    %v136 = vsub.f32 0.0, %v112
    %v137 = vsub.f32 1.0, %v122
    %v138 = vmul.f32 %v137, %v137
    %v139 = vmul.f32 %v135, %v138
    %v140 = vmul.f32 %v139, %v136
    %s141 = sadd.s32 0, 0
    %s142 = smul.u32 %s141, 128
    %v143 = vlaneseq
    %v144 = vand.u32 %v143, 127
    %v145 = vstv %s142
    %v146 = vadd.s32 %v145, %v144
    %vm147 = vcmp.lt.s32.totalorder %v146, 8
    %v148 = vsel %vm147, %v140, 0.0
    %v149 = vld [vmem:[#allocation2] sm:$0x1]
    %v150 = vadd.f32 %v149, %v148
    %151 = vst [vmem:[#allocation2] sm:$0x1] %v150
    // Predicated region
    $region18: #{tpu_custom_call.1} parent=1 // pred_check
      %p152 = pneg %p66
    $region19: #{tpu_custom_call.1} parent=1 // pred_check_branch
      %154 = sbr.rel (%p152) target = $region21
    $region20: #{tpu_custom_call.1} parent=1 // pred_region
      %v155 = vld [vmem:[#allocation2] sm:$0x1]
      %vm156 = vcmask 1040384
      %v157 = vsel %vm156, %v155, 0.0
      %158 = vadd.xlane.f32.xlu0 %v157
      %v159 = vpop.xlane.xlu0 %158
      %v160 = vrot.slane %v159, 4
      %v161 = vadd.f32 %v159, %v160
      %v162 = vrot.slane %v161, 2
      %v163 = vadd.f32 %v161, %v162
      %v164 = vrot.slane %v163, 1
      %v165 = vadd.f32 %v163, %v164
      %s166 = vtos %v165
      %v167 = vstv %s166
      %vm168 = vcmask 0
      %169 = vst.msk [vmem:[#allocation3] sm:$0x1] %vm168, %v167
    $region21: #{tpu_custom_call.1} parent=1 // pred_fallthru
      _
    // Predicated region
    $region22: #{tpu_custom_call.1} parent=1 // pred_check
      _
    $region23: #{tpu_custom_call.1} parent=1 // pred_check_branch
      %171 = sbr.rel (0) target = $region25
    $region24: #{tpu_custom_call.1} parent=1 // pred_region
      %s173 = ssub.s32 16, 16
      %174 = vsyncadd [#allocation4], %s173
      %s176 = sshll.u32 [#allocation3], 4
      %s177 = int_to_ptr.vmem [resolvable:$true] %s176
      %179 = dma.vmem_to_hbm [thread:$0]  %s177, 16, %s3, [#allocation4]
    $region25: #{tpu_custom_call.1} parent=1 // pred_fallthru
      _
    // Predicated region
    $region26: #{tpu_custom_call.1} parent=1 // pred_check
      _
    $region27: #{tpu_custom_call.1} parent=1 // pred_check_branch
      %181 = sbr.rel (0) target = $region29
    $region28: #{tpu_custom_call.1} parent=1 // pred_region
      %182 = dma.done [#allocation4], 16
    $region29: #{tpu_custom_call.1} parent=1 // pred_fallthru
      _
    %183 = vsyncpa [#allocation4], 1

</llo_original>
